<compile_context>
chip_gen: v6e
topology: v6e:2x2x1
jax: 0.10.0
libtpu: 0.0.40
codegen_flags: <defaults>
</compile_context>

<pallas_src>
import functools

import jax
import jax.numpy as jnp
from jax.experimental import pallas as pl
from jax.experimental.pallas import tpu as pltpu

NORM_EPS = 1e-12  # torch.nn.functional.normalize default eps


def _round_up(x, m):
    return (x + m - 1) // m * m


def _vmem_limit_bytes():
    """Per-generation scoped-VMEM limit: ~48 MiB on v7x (64 MiB phys), 96 MiB on v5e/v6e."""
    cap = 64 * 1024 * 1024
    try:
        info = pltpu.get_tpu_info()
        cap = int(getattr(info, "vmem_capacity_bytes", cap))
    except Exception:
        pass
    return max(32 * 1024 * 1024, min(cap * 3 // 4, 96 * 1024 * 1024))


# ---------------------------------------------------------------------------
# Stage 0: one-pass L2 normalization, f32 math, bf16 output (hoisted out of matmul)
# ---------------------------------------------------------------------------
def _normalize_kernel(x_ref, o_ref):
    x = x_ref[...].astype(jnp.float32)
    inv = jax.lax.rsqrt(jnp.maximum(jnp.sum(x * x, axis=1, keepdims=True),
                                    NORM_EPS * NORM_EPS))
    o_ref[...] = (x * inv).astype(o_ref.dtype)


def _l2_normalize_bf16(x, row_pad, vmem_limit):
    rows, d = x.shape
    xp = jnp.pad(x, ((0, row_pad - rows), (0, 0)))          # zero rows stay zero
    per_row = d * (2 * xp.dtype.itemsize + 12)               # dbuf in + dbuf bf16 out + f32 temps
    tr = 512
    while tr > 8 and (row_pad % tr or tr * per_row > vmem_limit // 2):
        tr //= 2
    return pl.pallas_call(
        _normalize_kernel,
        out_shape=jax.ShapeDtypeStruct((row_pad, d), jnp.bfloat16),
        grid=(row_pad // tr,),
        in_specs=[pl.BlockSpec((tr, d), lambda i: (i, 0))],
        out_specs=pl.BlockSpec((tr, d), lambda i: (i, 0)),
        compiler_params=pltpu.CompilerParams(
            dimension_semantics=("parallel",),
            vmem_limit_bytes=vmem_limit),
    )(xp)


# ---------------------------------------------------------------------------
# Stage 1: similarity matmul (bf16 MXU, f32 accumulate, bf16 output)
# ---------------------------------------------------------------------------
def _sim_kernel(q_ref, s_ref, mat_ref):
    mat_ref[...] = jax.lax.dot_general(
        q_ref[...], s_ref[...],
        dimension_numbers=(((1,), (1,)), ((), ())),
        preferred_element_type=jnp.float32).astype(mat_ref.dtype)


def _similarity_matrix(query, start, vmem_limit):
    M, D = query.shape
    N, _ = start.shape
    budget = (vmem_limit * 3) // 4

    m8 = _round_up(M, 8)
    tm = m8 if m8 <= 256 else min([256, 128], key=lambda t: (_round_up(M, t) - M, -t))
    n128 = _round_up(N, 128)
    tn = n128 if n128 <= 512 else min([512, 256, 128],
                                      key=lambda t: (_round_up(N, t) - N, -t))

    # Temporaries-aware VMEM budget: double-buffered bf16 inputs + double-buffered
    # bf16 output tile + the in-kernel f32 accumulator.
    while 4 * D * (tm + tn) + 8 * tm * tn > budget:
        if tn > 128:
            tn = 256 if tn > 256 else 128
        elif tm > 128:
            tm = 128
        elif tm > 8:
            tm = max(8, _round_up(tm // 2, 8))
        else:
            break

    m_pad = _round_up(M, tm)
    n_pad = _round_up(N, tn)
    gm, gn = m_pad // tm, n_pad // tn

    qn = _l2_normalize_bf16(query, m_pad, vmem_limit)        # (m_pad, D) bf16
    sn = _l2_normalize_bf16(start, n_pad, vmem_limit)        # (n_pad, D) bf16

    # Pick grid-axis order so the streamed operand re-reads fewer HBM bytes:
    # with j fastest, start is streamed gm times; with i fastest, query gn times.
    if gm * n_pad <= gn * m_pad:
        grid = (gm, gn)
        q_map = lambda i, j: (i, 0)
        s_map = lambda i, j: (j, 0)
        o_map = lambda i, j: (i, j)
    else:
        grid = (gn, gm)
        q_map = lambda j, i: (i, 0)
        s_map = lambda j, i: (j, 0)
        o_map = lambda j, i: (i, j)

    return pl.pallas_call(
        _sim_kernel,
        out_shape=jax.ShapeDtypeStruct((m_pad, n_pad), jnp.bfloat16),
        grid_spec=pltpu.PrefetchScalarGridSpec(
            num_scalar_prefetch=0,
            grid=grid,
            in_specs=[pl.BlockSpec((tm, D), q_map),
                      pl.BlockSpec((tn, D), s_map)],
            out_specs=pl.BlockSpec((tm, tn), o_map),
        ),
        compiler_params=pltpu.CompilerParams(
            dimension_semantics=("parallel", "parallel"),
            vmem_limit_bytes=vmem_limit),
    )(qn, sn)


# ---------------------------------------------------------------------------
# Stage 2: masked online-softmax pair loss with Q-tile skipping
# ---------------------------------------------------------------------------
def _loss_kernel(tq, qr_ref, pp_ref, pq_ref, out_ref, m_sc, l_sc):
    pi = pl.program_id(0)
    qi = pl.program_id(1)

    @pl.when(qi == 0)
    def _():
        # torch: max_val = max(pos, row-max of masked negatives) -> seed running max at pos.
        m_sc[...] = pp_ref[:, 0:1]
        l_sc[...] = jnp.zeros_like(l_sc)

    # Skip Q tiles that cannot contain this P tile's anchors (pairs are sorted by anchor,
    # so matching negatives occupy one contiguous [qlo, qhi) range).  Skipped tiles would
    # contribute exactly zero (all-(-inf) mask), so this is an identity transformation.
    q0 = qi * tq
    qlo = qr_ref[2 * pi]
    qhi = qr_ref[2 * pi + 1]

    @pl.when(jnp.logical_and(q0 < qhi, q0 + tq > qlo))
    def _():
        a1f = pp_ref[:, 1:2]                     # (TP, 1) anchor ids (exact in f32 < 2^24)
        neg = pq_ref[0:1, :]                     # (1, TQ) neg_pairs / T (pre-scaled outside)
        a2f = pq_ref[1:2, :]                     # (1, TQ)
        negm = jnp.where(a2f == a1f, neg, -jnp.inf)
        m_new = jnp.maximum(m_sc[...], jnp.max(negm, axis=1, keepdims=True))
        l_sc[...] = (l_sc[...] * jnp.exp(m_sc[...] - m_new)
                     + jnp.sum(jnp.exp(negm - m_new), axis=1, keepdims=True))
        m_sc[...] = m_new

    @pl.when(qi == pl.num_programs(1) - 1)
    def _():
        # TODO(synk): torch casts the row max to fp16 (.half()) before max with pos and adds
        # 1e-20 inside the log; the shift cancels in num/den and num/den is never 0, so the
        # direct log-sum-exp form is used here (no exp -> divide -> log round trip).
        d = pp_ref[:, 0:1] - m_sc[...]                               # pos - max_val  (<= 0)
        out_ref[...] = d - jnp.log(l_sc[...] + jnp.exp(d))           # per-anchor log-prob


def _pair_loss(mat, a1, p, a2, n, temperature, vmem_limit):
    P = int(a1.shape[0])
    Q = int(a2.shape[0])

    # Sort both pair lists by anchor id (the mean loss is order-invariant) -> contiguous
    # per-anchor negative ranges -> Q-tile skipping in the kernel.
    o1 = jnp.argsort(a1)
    a1s, ps = a1[o1], p[o1]
    o2 = jnp.argsort(a2)
    a2s, ns = a2[o2], n[o2]

    # Element gathers of only the P + Q needed similarities (bf16 mat -> f32), 1/T folded in.
    # TODO(synk): when P + Q << M*N the full mat could be avoided entirely by computing
    # per-pair row dots in Pallas; the full-matrix path is kept to also cover dense pair sets.
    inv_t = 1.0 / float(temperature)
    pos_pair = mat[a1s, ps].astype(jnp.float32) * inv_t
    neg_pair = mat[a2s, ns].astype(jnp.float32) * inv_t

    tp = min(128, _round_up(P, 8))
    p_pad = _round_up(P, tp)
    if p_pad // tp < 2 and p_pad >= 16 and (p_pad // 2) % 8 == 0:
        tp = p_pad // 2             # v7x megacore: give the parallel P axis >= 2 blocks
    num_pb = p_pad // tp

    tq = min(2048, _round_up(Q, 128))      # large Q tiles: ~16 KB/step, fewer grid steps
    q_pad = _round_up(Q, tq)

    # Lane/sublane-dense slabs: (pos, a1) -> (P_pad, 2) and (neg, a2) -> (2, Q_pad).
    pos_col = jnp.pad(pos_pair, (0, p_pad - P))
    a1_col = jnp.pad(a1s.astype(jnp.float32), (0, p_pad - P), constant_values=-1.0)
    packed_p = jnp.stack([pos_col, a1_col], axis=1)

    neg_row = jnp.pad(neg_pair, (0, q_pad - Q))
    a2_row = jnp.pad(a2s.astype(jnp.float32), (0, q_pad - Q), constant_values=-2.0)
    packed_q = jnp.stack([neg_row, a2_row], axis=0)

    # Per-P-tile [qlo, qhi) overlap ranges in the sorted negative list (scalar-prefetched).
    row_lo = jnp.arange(num_pb, dtype=jnp.int32) * tp
    row_hi = jnp.minimum(row_lo + tp - 1, P - 1)
    amin = a1s[jnp.minimum(row_lo, P - 1)]
    amax = a1s[row_hi]
    qlo = jnp.searchsorted(a2s, amin, side="left")
    qhi = jnp.searchsorted(a2s, amax, side="right")
    qranges = jnp.stack([qlo, qhi], axis=1).reshape(-1).astype(jnp.int32)

    log_probs = pl.pallas_call(
        functools.partial(_loss_kernel, tq),
        out_shape=jax.ShapeDtypeStruct((p_pad, 1), jnp.float32),
        grid_spec=pltpu.PrefetchScalarGridSpec(
            num_scalar_prefetch=1,
            grid=(num_pb, q_pad // tq),
            in_specs=[pl.BlockSpec((tp, 2), lambda i, j, qr: (i, 0)),
                      pl.BlockSpec((2, tq), lambda i, j, qr: (0, j))],
            out_specs=pl.BlockSpec((tp, 1), lambda i, j, qr: (i, 0)),
            scratch_shapes=[pltpu.VMEM((tp, 1), jnp.float32),   # running max
                            pltpu.VMEM((tp, 1), jnp.float32)],  # running denominator
        ),
        compiler_params=pltpu.CompilerParams(
            dimension_semantics=("parallel", "arbitrary"),
            vmem_limit_bytes=vmem_limit),
    )(qranges, packed_p, packed_q)

    # Mean over the true (un-padded) anchors only.
    return -jnp.mean(log_probs[:P, 0])


def ntxent_loss_wiki(query_re_output, start_re_output, indices_tuple, temperature):
    """Mirrors NTXentLoss_wiki.forward (normalize -> similarity -> pair-based loss)."""
    a1, p, a2, n = indices_tuple
    if int(a1.shape[0]) == 0 or int(a2.shape[0]) == 0:
        return jnp.float32(0.0)
    vmem_limit = _vmem_limit_bytes()
    mat = _similarity_matrix(query_re_output, start_re_output, vmem_limit)
    return _pair_loss(mat, a1, p, a2, n, temperature, vmem_limit)


# ---------------------------------------------------------------------------
# Pure-JAX reference (f32 everywhere) for sanity checking at test shapes.
# ---------------------------------------------------------------------------
def _reference_loss(query, start, indices_tuple, temperature):
    a1, p, a2, n = indices_tuple
    qn = query / jnp.maximum(
        jnp.sqrt(jnp.sum(query * query, axis=1, keepdims=True)), NORM_EPS)
    sn = start / jnp.maximum(
        jnp.sqrt(jnp.sum(start * start, axis=1, keepdims=True)), NORM_EPS)
    mat = qn @ sn.T
    pos = mat[a1, p][:, None] / temperature
    neg = mat[a2, n][None, :] / temperature
    negm = jnp.where(a2[None, :] == a1[:, None], neg, -jnp.inf)
    max_val = jnp.maximum(pos, jnp.max(negm, axis=1, keepdims=True))
    num = jnp.exp(pos - max_val)[:, 0]
    den = jnp.sum(jnp.exp(negm - max_val), axis=1) + num
    return jnp.mean(-jnp.log(num / den + 1e-20))


if __name__ == "__main__":
    key = jax.random.PRNGKey(0)

    # --- test 1: tiny shapes (single tile everywhere) ---------------------------------
    k1, k2, key = jax.random.split(key, 3)
    M, N, D = 8, 8, 32
    query = jax.random.normal(k1, (M, D), dtype=jnp.float32)
    start = jax.random.normal(k2, (N, D), dtype=jnp.float32)
    a1 = jnp.arange(M, dtype=jnp.int32)
    p = jnp.arange(N, dtype=jnp.int32)
    a2 = jnp.repeat(jnp.arange(M, dtype=jnp.int32), 3)
    n = (jnp.repeat(jnp.arange(M, dtype=jnp.int32), 3)
         + jnp.tile(jnp.arange(1, 4, dtype=jnp.int32), M)) % N
    loss = ntxent_loss_wiki(query, start, (a1, p, a2, n), 0.5)
    jax.block_until_ready(loss)
    ref = _reference_loss(query, start, (a1, p, a2, n), 0.5)
    if not jnp.allclose(loss, ref, rtol=5e-2, atol=5e-2):
        raise AssertionError(f"test1: kernel loss {float(loss)} != reference {float(ref)}")

    # --- test 2: exercises multi-Q-tile online softmax, tile skipping and megacore tp --
    k1, k2, key = jax.random.split(key, 3)
    M, N, D = 64, 64, 64
    query = jax.random.normal(k1, (M, D), dtype=jnp.float32)
    start = jax.random.normal(k2, (N, D), dtype=jnp.float32)
    a1 = jnp.arange(M, dtype=jnp.int32)
    p = jnp.arange(N, dtype=jnp.int32)
    reps = 41
    a2 = jnp.repeat(jnp.arange(M, dtype=jnp.int32), reps)
    n = (jnp.repeat(jnp.arange(M, dtype=jnp.int32), reps)
         + jnp.tile(jnp.arange(1, reps + 1, dtype=jnp.int32), M)) % N
    loss2 = ntxent_loss_wiki(query, start, (a1, p, a2, n), 1.0)
    jax.block_until_ready(loss2)
    ref2 = _reference_loss(query, start, (a1, p, a2, n), 1.0)
    if not jnp.allclose(loss2, ref2, rtol=5e-2, atol=5e-2):
        raise AssertionError(f"test2: kernel loss {float(loss2)} != reference {float(ref2)}")

    print("KERNEL_OK")
</pallas_src>

<mosaic_0001>
module attributes {stable_mosaic.version = 11 : i64} {
  func.func @_normalize_kernel(%arg0: i32, %arg1: memref<8x32xf32, #tpu.memory_space<vmem>>, %arg2: memref<8x32xbf16, #tpu.memory_space<vmem>>) attributes {dimension_semantics = [#tpu.dimension_semantics<parallel>], iteration_bounds = array<i64: 1>, scalar_prefetch = 0 : i64, scratch_operands = 0 : i64, tpu.core_type = #tpu.core_type<tc>, window_params = [{transform_indices = @transform_0, window_bounds = array<i64: 8, 32>}, {transform_indices = @transform_1, window_bounds = array<i64: 8, 32>}]} {
    %c0 = arith.constant 0 : index
    %c0_0 = arith.constant 0 : index
    %0 = vector.load %arg1[%c0, %c0_0] : memref<8x32xf32, #tpu.memory_space<vmem>>, vector<8x32xf32>
    %1 = arith.mulf %0, %0 : vector<8x32xf32>
    %cst = arith.constant dense<0.000000e+00> : vector<8xf32>
    %2 = vector.multi_reduction <add>, %1, %cst [1] : vector<8x32xf32> to vector<8xf32>
    %3 = vector.shape_cast %2 : vector<8xf32> to vector<8x1xf32>
    %cst_1 = arith.constant 1.000000e-24 : f32
    %4 = vector.broadcast %cst_1 : f32 to vector<8x1xf32>
    %5 = arith.maximumf %3, %4 : vector<8x1xf32>
    %6 = math.rsqrt %5 : vector<8x1xf32>
    %7 = vector.broadcast %6 : vector<8x1xf32> to vector<8x32xf32>
    %8 = arith.mulf %0, %7 : vector<8x32xf32>
    %9 = arith.truncf %8 : vector<8x32xf32> to vector<8x32xbf16>
    %c0_2 = arith.constant 0 : index
    %c0_3 = arith.constant 0 : index
    %10 = vector.load %arg2[%c0_2, %c0_3] : memref<8x32xbf16, #tpu.memory_space<vmem>>, vector<8x32xbf16>
    tpu.vector_store %arg2[%c0_2, %c0_3], %9 {strides = array<i32>} : memref<8x32xbf16, #tpu.memory_space<vmem>>, vector<8x32xbf16>,
    return
  }
  func.func @transform_0(%arg0: i32) -> (i32, i32) {
    %c0_i32 = arith.constant 0 : i32
    %c0_i32_0 = arith.constant 0 : i32
    return %arg0, %c0_i32 : i32, i32
  }
  func.func @transform_1(%arg0: i32) -> (i32, i32) {
    %c0_i32 = arith.constant 0 : i32
    %c0_i32_0 = arith.constant 0 : i32
    return %arg0, %c0_i32 : i32, i32
  }
}

</mosaic_0001>

<llo_original>
// kernel: tpu_custom_call.1
$region0: #{tpu_custom_call.1}
  #allocation0 [shape = 'u32[]', space=smem, size = 0x4, offset = 0x4, fixed_abs, tag = 'smem constant byte address 0x4 - core index']
  #allocation1 [shape = 'u32[144,128]{1,0:T(1,128)}', space=vmem, size = 0x12000, scoped, tag = 'internal scratch']
  %s0 = inlined_call_operand.hbm [shape: f32[8,32], index: 0, kind: input, shape index: {}]
  %s1 = inlined_call_operand.hbm [shape: bf16[8,32], index: 1, kind: output, shape index: {}]
  %s2 = sld [smem:[#allocation0]]
  $region18: #{tpu_custom_call.1} parent=0
    _
  %s4 = ssub.s32 1, %s2
  %s5 = scalar_select 0, %s4, %s2
  $region1: #{tpu_custom_call.1} parent=0
    #allocation2 [shape = 'u8[4096]{0}', space=vmem, size = 0x1000, scoped, tag = 'input window, operand 0, single buffered']
    #allocation3 [shape = 's32[1]{0}', space=sflag, size = 0x4, scoped, tag = 'scoped memory for tpu_custom_call.1']
    #allocation4 [shape = 's32[1]{0}', space=sflag, size = 0x4, scoped, tag = 'scoped memory for tpu_custom_call.1']
    #allocation5 [shape = 'u8[2048]{0}', space=vmem, size = 0x800, scoped, tag = 'output window, operand 0, single buffered']
    %6 = vsyncpa [#allocation3], 0
    %7 = vsyncpa [#allocation4], 0
    // Predicated region
    $region2: #{tpu_custom_call.1} parent=1 // pred_check
      _
    $region3: #{tpu_custom_call.1} parent=1 // pred_check_branch
      %9 = sbr.rel (0) target = $region5
    $region4: #{tpu_custom_call.1} parent=1 // pred_region
      %s11 = ssub.s32 128, 128
      %12 = vsyncadd [#allocation3], %s11
      %s14 = sshll.u32 [#allocation2], 4
      %s15 = int_to_ptr.vmem [resolvable:$true] %s14
      %17 = dma.hbm_to_vmem [thread:$0]  %s0, 128, %s15, [#allocation3]
    $region5: #{tpu_custom_call.1} parent=1 // pred_fallthru
      _
    // Predicated region
    $region6: #{tpu_custom_call.1} parent=1 // pred_check
      _
    $region7: #{tpu_custom_call.1} parent=1 // pred_check_branch
      %19 = sbr.rel (0) target = $region9
    $region8: #{tpu_custom_call.1} parent=1 // pred_region
      %20 = dma.done [#allocation3], 128
    $region9: #{tpu_custom_call.1} parent=1 // pred_fallthru
      _
    %v21 = vld [vmem:[#allocation2] sm:$0xff]
    %v22 = vmul.f32 %v21, %v21
    %vm23 = vcmask 261120
    %v24 = vsel %vm23, %v22, 0.0
    %25 = vadd.xlane.f32.xlu0 %v24
    %v26 = vpop.xlane.xlu0 %25
    %v27 = vmax.f32 %v26, 1e-24
    %v28 = vrsqrt.pop %v27
    %v29 = vmul.f32 %v21, %v28
    %v30 = vpack.c.bf16 %v29, %v29
    %vm31 = vcmask 257024
    %32 = vst.msk [vmem:[#allocation5] sm:$0xf] %vm31, %v30
    // Predicated region
    $region10: #{tpu_custom_call.1} parent=1 // pred_check
      _
    $region11: #{tpu_custom_call.1} parent=1 // pred_check_branch
      %34 = sbr.rel (0) target = $region13
    $region12: #{tpu_custom_call.1} parent=1 // pred_region
      %s36 = ssub.s32 64, 64
      %37 = vsyncadd [#allocation4], %s36
      %s39 = sshll.u32 [#allocation5], 4
      %s40 = int_to_ptr.vmem [resolvable:$true] %s39
      %42 = dma.vmem_to_hbm [thread:$0]  %s40, 64, %s1, [#allocation4]
    $region13: #{tpu_custom_call.1} parent=1 // pred_fallthru
      _
    // Predicated region
    $region14: #{tpu_custom_call.1} parent=1 // pred_check
      _
    $region15: #{tpu_custom_call.1} parent=1 // pred_check_branch
      %44 = sbr.rel (0) target = $region17
    $region16: #{tpu_custom_call.1} parent=1 // pred_region
      %45 = dma.done [#allocation4], 64
    $region17: #{tpu_custom_call.1} parent=1 // pred_fallthru
      _
    %46 = vsyncpa [#allocation3], 1
    %47 = vsyncpa [#allocation4], 1

</llo_original>
